<compile_context>
chip_gen: v7x
topology: tpu7x:2x2x1
jax: 0.10.0
libtpu: 0.0.40
codegen_flags: <defaults>
</compile_context>

<pallas_src>
import functools

import jax
import jax.numpy as jnp
from jax.experimental import pallas as pl
from jax.experimental.pallas import tpu as pltpu


# ---------------------------------------------------------------------------
# Kernels
# ---------------------------------------------------------------------------

def _shakedrop_kernel(x_ref, scale_ref, o_ref):
    # x_ref: (block_n, block_f), scale_ref: (block_n, 1) -> lane broadcast.
    o_ref[...] = x_ref[...] * scale_ref[...]


def _shakedrop_residual_kernel(x_ref, scale_ref, r_ref, o_ref):
    # Fused ShakeDrop + shortcut add, residual cast in-kernel (VPU has slack
    # in this mem-bound kernel; avoids a separate XLA cast pass over HBM).
    x = x_ref[...].astype(jnp.float32)
    s = scale_ref[...].astype(jnp.float32)
    r = r_ref[...].astype(jnp.float32)
    o_ref[...] = (x * s + r).astype(o_ref.dtype)


# ---------------------------------------------------------------------------
# Generation-aware budgets & tiling
# ---------------------------------------------------------------------------

def _tpu_budget():
    """(per-operand tile target bytes, vmem_limit clamp bytes)."""
    vmem = 128 << 20
    try:
        info = pltpu.get_tpu_info()
        for attr in ("vmem_capacity_bytes", "vmem_bytes", "vmem_size_bytes"):
            v = getattr(info, attr, None)
            if v:
                vmem = int(v)
                break
    except Exception:
        pass
    if vmem <= (64 << 20):
        # v7x-class: 64 MiB physical per TC, 32 MiB scoped default -> bigger
        # tiles (HBM is fast so per-step overhead matters) but tighter clamp.
        return 4 << 20, 28 << 20
    # v5e / v6e: 128 MiB VMEM; 2 MiB tiles already sit at ~85% of roofline.
    return 2 << 20, 48 << 20


def _pick_units(total_units, max_units, ragged):
    """Choose k unit-blocks per tile, preferring an even divisor if clean."""
    k = max(1, min(total_units, max_units))
    if not ragged:
        while k > 1 and total_units % k:
            k -= 1
    return k


def _choose_tiles(N, F, itemsize, target_bytes):
    """Pick (block_n, block_f, n_major) for the flattened [N, F] layout.

    Blocks are (multiple-of-sublane, multiple-of-128) whenever the dim is at
    least one tile; otherwise full-extent (dim is tiny, cannot blow VMEM).
    The grid is a cdiv grid, so blocks need not divide N/F — Pallas masks the
    ragged last block.
    """
    sublane = max(8, 32 // itemsize)          # 8 f32 / 16 bf16 / 32 int8
    lane = 128

    # Lane (feature) axis.
    if F <= lane:
        block_f = F
    else:
        max_f_units = max(1, target_bytes // (sublane * lane * itemsize))
        block_f = lane * _pick_units(F // lane, max_f_units, ragged=(F % lane != 0))

    # Sublane (batch) axis.
    if N <= sublane:
        block_n = N
    else:
        max_n_units = max(1, target_bytes // (block_f * sublane * itemsize))
        block_n = sublane * _pick_units(N // sublane, max_n_units,
                                        ragged=(N % sublane != 0))

    # Keep enough grid steps for pipelining + megacore sharding (>= 2 per
    # v7x TensorCore, ideally >= 8 total), without shrinking blocks below
    # ~512 KiB once we already have >= 2 steps.
    min_steps, floor_bytes = 8, 512 << 10
    while True:
        steps = pl.cdiv(N, block_n) * pl.cdiv(F, block_f)
        if steps >= min_steps:
            break
        if steps >= 2 and block_n * block_f * itemsize <= floor_bytes:
            break
        f_units = block_f // lane
        n_units = block_n // sublane
        if f_units >= n_units and f_units >= 2:
            block_f = -(-(block_f // 2) // lane) * lane
        elif n_units >= 2:
            block_n = -(-(block_n // 2) // sublane) * sublane
        else:
            break

    n_major = pl.cdiv(N, block_n) >= pl.cdiv(F, block_f)
    return block_n, block_f, n_major


# ---------------------------------------------------------------------------
# pallas_call wrapper
# ---------------------------------------------------------------------------

@functools.partial(jax.jit, static_argnames=("block_n", "block_f", "n_major"))
def _scaled_mul(x2d, scale2d, residual2d=None, *, block_n, block_f, n_major):
    """out[n, f] = x2d[n, f] * scale2d[n, 0] (+ residual2d[n, f], any dtype)."""
    N, F = x2d.shape
    gN = pl.cdiv(N, block_n)
    gF = pl.cdiv(F, block_f)

    # Put the axis with more blocks first so the leading parallel axis keeps
    # both v7x TensorCores busy; re-fetching the tiny scale tile is negligible.
    if n_major:
        grid = (gN, gF)
        data_map = lambda i, j: (i, j)
        scale_map = lambda i, j: (i, 0)
    else:
        grid = (gF, gN)
        data_map = lambda i, j: (j, i)
        scale_map = lambda i, j: (j, 0)

    data_spec = pl.BlockSpec((block_n, block_f), data_map)
    scale_spec = pl.BlockSpec((block_n, 1), scale_map)

    operand_dtypes = [x2d.dtype]
    if residual2d is None:
        kernel = _shakedrop_kernel
        in_specs = [data_spec, scale_spec]
        operands = (x2d, scale2d)
        flops = N * F
        bytes_accessed = 2 * N * F * x2d.dtype.itemsize + N * scale2d.dtype.itemsize
    else:
        kernel = _shakedrop_residual_kernel
        in_specs = [data_spec, scale_spec, data_spec]  # residual: native dtype
        operands = (x2d, scale2d, residual2d)
        operand_dtypes.append(residual2d.dtype)
        flops = 2 * N * F
        bytes_accessed = (2 * N * F * x2d.dtype.itemsize
                          + N * F * residual2d.dtype.itemsize
                          + N * scale2d.dtype.itemsize)
    operand_dtypes.append(x2d.dtype)  # output

    # VMEM budget: double-buffered tensor tiles (rounded to physical padded
    # shapes) + the lane-padded (block_n, 128) scale tile + headroom.
    target_bytes, clamp = _tpu_budget()
    lane_pad_f = -(-block_f // 128) * 128
    sub_pad_n = -(-block_n // 32) * 32
    tile_bytes = sum(sub_pad_n * lane_pad_f * d.itemsize for d in operand_dtypes)
    scale_bytes = sub_pad_n * 128 * scale2d.dtype.itemsize
    vmem_limit = int(min(clamp, max(2 * (tile_bytes + scale_bytes) + (2 << 20),
                                    16 << 20)))

    return pl.pallas_call(
        kernel,
        out_shape=jax.ShapeDtypeStruct((N, F), x2d.dtype),
        grid_spec=pltpu.PrefetchScalarGridSpec(
            num_scalar_prefetch=0,
            grid=grid,
            in_specs=in_specs,
            out_specs=data_spec,
        ),
        compiler_params=pltpu.CompilerParams(
            dimension_semantics=("parallel", "parallel"),
            vmem_limit_bytes=vmem_limit,
        ),
        cost_estimate=pl.CostEstimate(
            flops=flops, transcendentals=0, bytes_accessed=bytes_accessed),
    )(*operands)


def apply_shakedrop_scale(x, scale, residual=None):
    """y = x * scale[:, None, None, None] (+ residual, cast in-kernel)."""
    N = x.shape[0]
    x2d = x.reshape(N, -1)
    F = x2d.shape[1]
    scale2d = scale.astype(x.dtype).reshape(N, 1)
    res2d = None if residual is None else residual.reshape(N, -1)  # native dtype

    target_bytes, _ = _tpu_budget()
    block_n, block_f, n_major = _choose_tiles(N, F, x2d.dtype.itemsize, target_bytes)
    out2d = _scaled_mul(x2d, scale2d, res2d,
                        block_n=block_n, block_f=block_f, n_major=n_major)
    return out2d.reshape(x.shape)


# ---------------------------------------------------------------------------
# ShakeDrop forward
# ---------------------------------------------------------------------------

def shakedrop(x, drop_prob, alpha_range=(-1.0, 1.0), training=True, key=None,
              residual=None):
    """JAX/Pallas equivalent of ShakeDrop.forward for an NCHW input x.

    `drop_prob` must be a static Python float (traced values would raise a
    concretization error).  If `residual` is given, the shortcut add is fused
    into the Pallas kernel (training path) to save one full HBM read + write.
    """
    drop_prob = float(drop_prob)
    if drop_prob == 0.0:
        # Identity: plain jnp, let XLA fuse.
        return x if residual is None else x + residual.astype(x.dtype)

    if not training:
        # Eval: constant expected scale -> plain jnp so XLA fuses it into the
        # producer/consumer (no extra HBM pass through a custom kernel).
        mean_alpha = 0.5 * (alpha_range[0] + alpha_range[1])
        exp_scale = (1.0 - drop_prob) + drop_prob * mean_alpha
        y = jnp.asarray(exp_scale, x.dtype) * x
        return y if residual is None else y + residual.astype(x.dtype)

    assert key is not None, "training=True requires a PRNG key"
    N = x.shape[0]
    kg, ka = jax.random.split(key)
    # scalar Bernoulli gate with P(gate=1) = 1 - drop_prob
    gate = jax.random.bernoulli(kg, 1.0 - drop_prob).astype(jnp.float32)
    # per-sample alpha ~ U(alpha_range)
    alpha = jax.random.uniform(ka, (N,), dtype=jnp.float32,
                               minval=alpha_range[0], maxval=alpha_range[1])
    # gate==1 -> scale 1 (identity); gate==0 -> scale alpha
    scale = (gate + (1.0 - gate) * alpha).astype(x.dtype)
    return apply_shakedrop_scale(x, scale, residual=residual)


class ShakeDrop:
    """Mirror of the PyTorch module interface (forward only)."""

    def __init__(self, drop_prob, alpha_range=(-1.0, 1.0)):
        self.drop_prob = drop_prob
        self.alpha_range = alpha_range
        self.training = True

    def __call__(self, x, key=None, residual=None):
        if self.drop_prob != 0:
            return shakedrop(x, self.drop_prob, self.alpha_range,
                             self.training, key=key, residual=residual)
        return x if residual is None else x + residual.astype(x.dtype)


# ---------------------------------------------------------------------------
# Self-test
# ---------------------------------------------------------------------------

if __name__ == "__main__":
    key = jax.random.PRNGKey(0)
    kx, kr, kdrop = jax.random.split(key, 3)

    # NCHW input, small shapes.
    x = jax.random.normal(kx, (2, 4, 16, 16), dtype=jnp.float32)
    module = ShakeDrop(drop_prob=0.5, alpha_range=(-1.0, 1.0))

    # Training mode (stochastic): shape/dtype smoke test (Pallas path).
    module.training = True
    y_train = jax.block_until_ready(module(x, key=kdrop))
    assert y_train.shape == x.shape and y_train.dtype == x.dtype

    # Eval mode: plain jnp path, y = (1 - p + p*mean(alpha)) * x = 0.5 * x.
    module.training = False
    y_eval = jax.block_until_ready(module(x))
    assert jnp.allclose(y_eval, 0.5 * x, atol=1e-6), "eval path mismatch"

    # Deterministic per-sample scale (exercises the broadcast-mul kernel).
    scale = jnp.array([0.3, -0.7], dtype=jnp.float32)
    y = jax.block_until_ready(apply_shakedrop_scale(x, scale))
    ref = x * scale[:, None, None, None]
    assert jnp.allclose(y, ref, atol=1e-6), "scale path mismatch"

    # Fused residual add with a DIFFERENT residual dtype (cast is in-kernel).
    shortcut = jax.random.normal(kr, x.shape, dtype=jnp.bfloat16)
    y_fused = jax.block_until_ready(
        apply_shakedrop_scale(x, scale, residual=shortcut))
    ref_fused = ref + shortcut.astype(jnp.float32)
    assert jnp.allclose(y_fused, ref_fused, atol=1e-5), "fused path mismatch"

    # F < 128 (not a multiple of 128) -> full-extent lane block, no padding.
    x_odd = jax.random.normal(kx, (2, 3, 5, 7), dtype=jnp.float32)   # F = 105
    s_odd = jnp.array([1.0, -0.25], dtype=jnp.float32)
    y_odd = jax.block_until_ready(apply_shakedrop_scale(x_odd, s_odd))
    assert jnp.allclose(y_odd, x_odd * s_odd[:, None, None, None], atol=1e-6)

    # Ragged batch (N not a multiple of 8) -> cdiv grid, masked last block.
    x_rag = jax.random.normal(kx, (10, 4, 16, 16), dtype=jnp.float32)
    s_rag = jnp.linspace(-1.0, 1.0, 10, dtype=jnp.float32)
    y_rag = jax.block_until_ready(apply_shakedrop_scale(x_rag, s_rag))
    assert jnp.allclose(y_rag, x_rag * s_rag[:, None, None, None], atol=1e-6)

    # F >= 128 but not a multiple of 128 -> ragged lane block.
    x_f = jax.random.normal(kx, (8, 3, 10, 10), dtype=jnp.float32)   # F = 300
    s_f = jnp.linspace(0.1, 1.0, 8, dtype=jnp.float32)
    y_f = jax.block_until_ready(apply_shakedrop_scale(x_f, s_f))
    assert jnp.allclose(y_f, x_f * s_f[:, None, None, None], atol=1e-6)

    print("KERNEL_OK")
</pallas_src>

<mosaic_0001>
module attributes {stable_mosaic.version = 11 : i64} {
  func.func @_shakedrop_kernel(%arg0: i32, %arg1: i32, %arg2: memref<2x512xf32, #tpu.memory_space<vmem>>, %arg3: memref<2x1xf32, #tpu.memory_space<vmem>>, %arg4: memref<2x512xf32, #tpu.memory_space<vmem>>) attributes {dimension_semantics = [#tpu.dimension_semantics<parallel>, #tpu.dimension_semantics<parallel>], iteration_bounds = array<i64: 2, 1>, scalar_prefetch = 0 : i64, scratch_operands = 0 : i64, tpu.core_type = #tpu.core_type<tc>, window_params = [{transform_indices = @transform_0, window_bounds = array<i64: 2, 512>}, {transform_indices = @transform_1, window_bounds = array<i64: 2, 1>}, {transform_indices = @transform_2, window_bounds = array<i64: 2, 512>}]} {
    %c0 = arith.constant 0 : index
    %c0_0 = arith.constant 0 : index
    %0 = vector.load %arg2[%c0, %c0_0] : memref<2x512xf32, #tpu.memory_space<vmem>>, vector<2x512xf32>
    %c0_1 = arith.constant 0 : index
    %c0_2 = arith.constant 0 : index
    %1 = vector.load %arg3[%c0_1, %c0_2] : memref<2x1xf32, #tpu.memory_space<vmem>>, vector<2x1xf32>
    %2 = vector.broadcast %1 : vector<2x1xf32> to vector<2x512xf32>
    %3 = arith.mulf %0, %2 : vector<2x512xf32>
    %c0_3 = arith.constant 0 : index
    %c0_4 = arith.constant 0 : index
    %4 = vector.load %arg4[%c0_3, %c0_4] : memref<2x512xf32, #tpu.memory_space<vmem>>, vector<2x512xf32>
    tpu.vector_store %arg4[%c0_3, %c0_4], %3 {strides = array<i32>} : memref<2x512xf32, #tpu.memory_space<vmem>>, vector<2x512xf32>,
    return
  }
  func.func @transform_0(%arg0: i32, %arg1: i32) -> (i32, i32) {
    %c0_i32 = arith.constant 0 : i32
    return %arg1, %arg0 : i32, i32
  }
  func.func @transform_1(%arg0: i32, %arg1: i32) -> (i32, i32) {
    %c0_i32 = arith.constant 0 : i32
    %c0_i32_0 = arith.constant 0 : i32
    return %arg1, %c0_i32 : i32, i32
  }
  func.func @transform_2(%arg0: i32, %arg1: i32) -> (i32, i32) {
    %c0_i32 = arith.constant 0 : i32
    return %arg1, %arg0 : i32, i32
  }
}

</mosaic_0001>

<llo_original>
// kernel: _scaled_mul.1
$region0: #{_scaled_mul.1}
  #allocation0 [shape = 'u32[]', space=smem, size = 0x4, offset = 0x4, fixed_abs, tag = 'smem constant byte address 0x4 - core index']
  #allocation1 [shape = 'u32[144,128]{1,0:T(1,128)}', space=vmem, size = 0x12000, scoped, tag = 'internal scratch']
  %s0 = inlined_call_operand.hbm [shape: f32[2,1024], index: 0, kind: input, shape index: {}]
  %s1 = inlined_call_operand.vmem [shape: f32[2,1], index: 1, kind: input, shape index: {}]
  %s2 = inlined_call_operand.hbm [shape: f32[2,1024], index: 2, kind: output, shape index: {}]
  %s3 = sld [smem:[#allocation0]]
  $region45: #{_scaled_mul.1} parent=0
    _
  %s5 = ssub.s32 1, %s3
  %s6 = scalar_select 0, %s5, %s3
  $region1: #{_scaled_mul.1} parent=0
    #allocation2 [shape = 'u8[8192]{0}', space=vmem, size = 0x2000, scoped, tag = 'input window, operand 0']
    #allocation3 [shape = 's32[2]{0}', space=sflag, size = 0x8, scoped, tag = 'scoped memory for _scaled_mul.1']
    #allocation4 [shape = 's32[2]{0}', space=sflag, size = 0x8, scoped, tag = 'scoped memory for _scaled_mul.1']
    #allocation5 [shape = 'u8[8192]{0}', space=vmem, size = 0x2000, scoped, tag = 'output window, operand 0']
    %7 = vsyncpa [#allocation3], 0
    %s8 = scalar_lea.sflag [#allocation3], 1
    %9 = vsyncpa %s8, 0
    %10 = vsyncpa [#allocation4], 0
    %s11 = scalar_lea.sflag [#allocation4], 1
    %12 = vsyncpa %s11, 0
    loop: start=0, step=1, limit=4
    $region2: #{_scaled_mul.1} parent=1 // loop_pre_header
      _
    $region3: #{_scaled_mul.1} parent=1 // loop_header
      %s14 = sphi 0, %s18
      %p15 = scmp.ge.s32.totalorder %s14, 4
      %s21 = sphi 0, %s33
      %s22 = sphi 0, %s29
      %s23 = sphi 0, %s21
      %s24 = sphi 0, %s22
      %s25 = sphi 0, %s23
      %s26 = sphi 0, %s24
      %s38 = sphi 0, %s40
      %s41 = sphi 0, %s38
      %s42 = sphi 0, %s41
      %s58 = sphi 0, %s42
      %s64 = sphi 0, %s66
      %s67 = sphi 0, %s64
      %s68 = sphi 0, %s67
      %s84 = sphi 0, %s68
      %s92 = sphi 0, %s94
      %s95 = sphi 0, %s92
      %s96 = sphi 0, %s95
      %s112 = sphi 0, %s96
    $region4: #{_scaled_mul.1} parent=1 // loop_header_branch
      %17 = sbr.rel (%p15) target = $region8
    $region5: #{_scaled_mul.1} parent=1 // loop_body
      %s19 = ssub.s32 %s14, 1
      %s20 = ssub.s32 %s14, 2
      %s27 = sadd.s32 1, %s22
      %p28 = scmp.ge.s32.totalorder %s27, 1
      %s29 = scalar_select %p28, 0, %s27
      %s30 = sadd.s32 1, %s21
      %s31 = scalar_select %p28, %s30, %s21
      %p32 = scmp.ge.s32.totalorder %s31, 2
      %s33 = scalar_select %p32, 0, %s31
      %s34 = ssub.s32 %s22, %s29
      %s35 = ssub.s32 %s21, %s33
      %s36 = sor.u32 %s34, %s35
      %p37 = scmp.eq.s32.totalorder %s36, 0
      %s39 = sadd.s32 %s38, 1
      %s40 = scalar_select %p37, %s38, %s39
      %p43 = pneg %p37
      %p44 = scmp.eq.s32.totalorder %s14, 1
      %p45 = por %p43, %p44
      %p46 = scmp.ne.s32.totalorder %s38, %s41
      %p47 = scmp.eq.s32.totalorder %s14, 0
      %p48 = por %p46, %p47
      %p49 = scmp.ne.s32.totalorder %s38, %s41
      %p50 = scmp.eq.s32.totalorder %s19, 1
      %p51 = por %p49, %p50
      %p52 = scmp.ne.s32.totalorder %s41, %s42
      %p53 = scmp.eq.s32.totalorder %s19, 0
      %p54 = por %p52, %p53
      %p55 = scmp.ne.s32.totalorder %s41, %s42
      %p56 = scmp.eq.s32.totalorder %s20, 1
      %p57 = por %p55, %p56
      %p59 = scmp.ne.s32.totalorder %s42, %s58
      %p60 = scmp.eq.s32.totalorder %s20, 0
      %p61 = por %p59, %p60
      %s62 = ssub.s32 %s22, %s29
      %p63 = scmp.eq.s32.totalorder %s62, 0
      %s65 = sadd.s32 %s64, 1
      %s66 = scalar_select %p63, %s64, %s65
      %p69 = pneg %p63
      %p70 = scmp.eq.s32.totalorder %s14, 1
      %p71 = por %p69, %p70
      %p72 = scmp.ne.s32.totalorder %s64, %s67
      %p73 = scmp.eq.s32.totalorder %s14, 0
      %p74 = por %p72, %p73
      %p75 = scmp.ne.s32.totalorder %s64, %s67
      %p76 = scmp.eq.s32.totalorder %s19, 1
      %p77 = por %p75, %p76
      %p78 = scmp.ne.s32.totalorder %s67, %s68
      %p79 = scmp.eq.s32.totalorder %s19, 0
      %p80 = por %p78, %p79
      %p81 = scmp.ne.s32.totalorder %s67, %s68
      %p82 = scmp.eq.s32.totalorder %s20, 1
      %p83 = por %p81, %p82
      %p85 = scmp.ne.s32.totalorder %s68, %s84
      %p86 = scmp.eq.s32.totalorder %s20, 0
      %p87 = por %p85, %p86
      %s88 = ssub.s32 %s22, %s29
      %s89 = ssub.s32 %s21, %s33
      %s90 = sor.u32 %s88, %s89
      %p91 = scmp.eq.s32.totalorder %s90, 0
      %s93 = sadd.s32 %s92, 1
      %s94 = scalar_select %p91, %s92, %s93
      %p97 = pneg %p91
      %p98 = scmp.eq.s32.totalorder %s14, 1
      %p99 = por %p97, %p98
      %p100 = scmp.ne.s32.totalorder %s92, %s95
      %p101 = scmp.eq.s32.totalorder %s14, 0
      %p102 = por %p100, %p101
      %p103 = scmp.ne.s32.totalorder %s92, %s95
      %p104 = scmp.eq.s32.totalorder %s19, 1
      %p105 = por %p103, %p104
      %p106 = scmp.ne.s32.totalorder %s95, %s96
      %p107 = scmp.eq.s32.totalorder %s19, 0
      %p108 = por %p106, %p107
      %p109 = scmp.ne.s32.totalorder %s95, %s96
      %p110 = scmp.eq.s32.totalorder %s20, 1
      %p111 = por %p109, %p110
      %p113 = scmp.ne.s32.totalorder %s96, %s112
      %p114 = scmp.eq.s32.totalorder %s20, 0
      %p115 = por %p113, %p114
      %p116 = scmp.le.s32.totalorder 1, %s14
      %p117 = scmp.lt.s32.totalorder %s14, 3
      %p118 = pnand %p116, %p117
      %p119 = pneg %p118
      // Predicated region
      $region9: #{_scaled_mul.1} parent=5 // pred_check
        _
      $region10: #{_scaled_mul.1} parent=5 // pred_check_branch
        %121 = sbr.rel (%p118) target = $region12
      $region11: #{_scaled_mul.1} parent=5 // pred_region
        %s122 = ssub.s32 %s14, 1
        // Predicated region
        $region13: #{_scaled_mul.1} parent=11 // pred_check
          %p123 = pneg %p80
        $region14: #{_scaled_mul.1} parent=11 // pred_check_branch
          %125 = sbr.rel (%p123) target = $region16
        $region15: #{_scaled_mul.1} parent=11 // pred_region
          %p126 = scmp.lt.s32.totalorder %s24, 0
          %s127 = scalar_select %p126, %s24, 0
          %s128 = smul.addr %s127, 2
          %s129 = scalar_lea.vmem %s1, %s128
        $region16: #{_scaled_mul.1} parent=11 // pred_fallthru
          _
      $region12: #{_scaled_mul.1} parent=5 // pred_fallthru
        _
      %p130 = scmp.lt.s32.totalorder %s14, 2
      // Predicated region
      $region17: #{_scaled_mul.1} parent=5 // pred_check
        %p131 = pneg %p130
      $region18: #{_scaled_mul.1} parent=5 // pred_check_branch
        %133 = sbr.rel (%p131) target = $region20
      $region19: #{_scaled_mul.1} parent=5 // pred_region
        // Predicated region
        $region21: #{_scaled_mul.1} parent=19 // pred_check
          %p134 = pneg %p48
        $region22: #{_scaled_mul.1} parent=19 // pred_check_branch
          %136 = sbr.rel (%p134) target = $region24
        $region23: #{_scaled_mul.1} parent=19 // pred_region
          %s137 = sand.u32 %s38, 1
          %s138 = scalar_lea.sflag [#allocation3], %s137
          %s139 = sand.u32 %s38, 1
          %s140 = smul.addr %s139, 8
          %s141 = scalar_lea.vmem [#allocation2], %s140
          %s142 = smul.u32 4, %s21
          %s144 = ssub.s32 128, 128
          %145 = vsyncadd %s138, %s144
          %s146 = smul.addr %s22, 8
          %s147 = sadd.s32 %s142, %s146
          %s148 = smul.addr %s147, 32
          %s149 = scalar_lea.hbm %s0, %s148
          %s151 = sshll.u32 %s141, 4
          %s152 = int_to_ptr.vmem [resolvable:$true] %s151
          %154 = dma.hbm_to_vmem [thread:$0]  %s149, 128, %s152, %s138
        $region24: #{_scaled_mul.1} parent=19 // pred_fallthru
          _
      $region20: #{_scaled_mul.1} parent=5 // pred_fallthru
        _
      %p155 = scmp.le.s32.totalorder 1, %s14
      %p156 = scmp.lt.s32.totalorder %s14, 3
      %p157 = pnand %p155, %p156
      %p158 = pneg %p157
      // Predicated region
      $region25: #{_scaled_mul.1} parent=5 // pred_check
        _
      $region26: #{_scaled_mul.1} parent=5 // pred_check_branch
        %160 = sbr.rel (%p157) target = $region28
      $region27: #{_scaled_mul.1} parent=5 // pred_region
        %s161 = ssub.s32 %s14, 1
        %s162 = sand.u32 %s41, 1
        %s163 = scalar_lea.sflag [#allocation3], %s162
        %s164 = sand.u32 %s41, 1
        %s165 = smul.addr %s164, 8
        %s166 = scalar_lea.vmem [#allocation2], %s165
        // Predicated region
        $region29: #{_scaled_mul.1} parent=27 // pred_check
          %p167 = pneg %p54
        $region30: #{_scaled_mul.1} parent=27 // pred_check_branch
          %169 = sbr.rel (%p167) target = $region32
        $region31: #{_scaled_mul.1} parent=27 // pred_region
          %170 = dma.done %s163, 128
        $region32: #{_scaled_mul.1} parent=27 // pred_fallthru
          _
        %s171 = sand.u32 %s41, 1
        %s172 = scalar_lea.sflag [#allocation3], %s171
        %s173 = sand.u32 %s41, 1
        %s174 = smul.addr %s173, 8
        %s175 = scalar_lea.vmem [#allocation2], %s174
        %p176 = pneg %p54
        %p177 = pneg %p51
        %p178 = scmp.lt.s32.totalorder %s24, 0
        %s179 = scalar_select %p178, %s24, 0
        %s180 = smul.addr %s179, 2
        %s181 = scalar_lea.vmem %s1, %s180
        %p182 = pneg %p80
        %p183 = pneg %p77
        %p184 = pneg %p108
        %p185 = pneg %p105
        %s186 = sand.u32 %s95, 1
        %s187 = scalar_lea.sflag [#allocation4], %s186
        %s188 = sand.u32 %s95, 1
        %s189 = smul.addr %s188, 8
        %s190 = scalar_lea.vmem [#allocation5], %s189
        %s191 = smul.u32 4, %s23
        %p192 = scmp.lt.s32.totalorder %s24, 0
        %s193 = scalar_select %p192, %s24, 0
        %s194 = smul.addr %s193, 2
        %s195 = scalar_lea.vmem %s1, %s194
        %s196 = smul.u32 4, %s23
        %v197 = vld [vmem:[%s166] sm:$0xff]
        %v198 = vld [vmem:[%s195] sm:$0x3]
        %200 = vset.pattern.permute.xlu0 0
        %201 = vperm.xlu0 %200, %v198
        %v202 = vpop.permute.xlu0 %201
        %v204 = vunpack.c.l.s4 269488144
        %v205 = vunpack.c.0.s8 %v204
        %v206 = vlaneseq
        %v207 = vshrl.u32 %v206, 7
        %v208 = vsub.s32 %v205, %v207
        %v209 = vrot.slane %v202, %v208
        %v211 = vmul.f32 %v197, %v209
        %212 = vst [vmem:[%s190] sm:$0xff] %v211
        %s213 = sand.u32 %s95, 1
        %s214 = scalar_lea.sflag [#allocation4], %s213
        %s215 = sand.u32 %s95, 1
        %s216 = smul.addr %s215, 8
        %s217 = scalar_lea.vmem [#allocation5], %s216
        // Predicated region
        $region33: #{_scaled_mul.1} parent=27 // pred_check
          %p218 = pneg %p105
        $region34: #{_scaled_mul.1} parent=27 // pred_check_branch
          %220 = sbr.rel (%p218) target = $region36
        $region35: #{_scaled_mul.1} parent=27 // pred_region
          %s221 = smul.u32 4, %s23
          %s223 = ssub.s32 128, 128
          %224 = vsyncadd %s214, %s223
          %s225 = smul.addr %s24, 8
          %s226 = sadd.s32 %s221, %s225
          %s227 = smul.addr %s226, 32
          %s228 = scalar_lea.hbm %s2, %s227
          %s230 = sshll.u32 %s217, 4
          %s231 = int_to_ptr.vmem [resolvable:$true] %s230
          %233 = dma.vmem_to_hbm [thread:$0]  %s231, 128, %s228, %s214
        $region36: #{_scaled_mul.1} parent=27 // pred_fallthru
          _
      $region28: #{_scaled_mul.1} parent=5 // pred_fallthru
        _
      %p234 = scmp.le.s32.totalorder 2, %s14
      // Predicated region
      $region37: #{_scaled_mul.1} parent=5 // pred_check
        %p235 = pneg %p234
      $region38: #{_scaled_mul.1} parent=5 // pred_check_branch
        %237 = sbr.rel (%p235) target = $region40
      $region39: #{_scaled_mul.1} parent=5 // pred_region
        %s238 = ssub.s32 %s14, 2
        // Predicated region
        $region41: #{_scaled_mul.1} parent=39 // pred_check
          %p239 = pneg %p111
        $region42: #{_scaled_mul.1} parent=39 // pred_check_branch
          %241 = sbr.rel (%p239) target = $region44
        $region43: #{_scaled_mul.1} parent=39 // pred_region
          %s242 = sand.u32 %s96, 1
          %s243 = scalar_lea.sflag [#allocation4], %s242
          %s244 = sand.u32 %s96, 1
          %s245 = smul.addr %s244, 8
          %s246 = scalar_lea.vmem [#allocation5], %s245
          %247 = dma.done %s243, 128
        $region44: #{_scaled_mul.1} parent=39 // pred_fallthru
          _
      $region40: #{_scaled_mul.1} parent=5 // pred_fallthru
        _
    $region6: #{_scaled_mul.1} parent=1 // loop_footer
      %s18 = sadd.s32 1, %s14
    $region7: #{_scaled_mul.1} parent=1 // loop_footer_branch
      %13 = sbr.rel target = $region3
    $region8: #{_scaled_mul.1} parent=1 // loop_exit
      _
    %248 = vsyncpa [#allocation3], 1
    %s249 = scalar_lea.sflag [#allocation3], 1
    %250 = vsyncpa %s249, 1
    %251 = vsyncpa [#allocation4], 1
    %s252 = scalar_lea.sflag [#allocation4], 1
    %253 = vsyncpa %s252, 1

</llo_original>
